<compile_context>
chip_gen: v7x
topology: tpu7x:2x2x1
jax: 0.10.0
libtpu: 0.0.40
codegen_flags: <defaults>
</compile_context>

<pallas_src>
import jax
import jax.numpy as jnp
from jax.experimental import pallas as pl
from jax.experimental.pallas import tpu as pltpu

EPS = 1e-5


def _cbn_kernel(y_ref, x_ref, g_tbl_ref, b_tbl_ref, o_ref):
    # x block: (N, TILE_C).  N is the FULL batch -> batch statistics are exact.
    x = x_ref[...].astype(jnp.float32)
    mean = jnp.mean(x, axis=0, keepdims=True)                       # (1, T)
    var = jnp.mean((x - mean) * (x - mean), axis=0, keepdims=True)  # biased batch var
    inv_std = jax.lax.rsqrt(var + EPS)                              # EUP
    out = (x - mean) * inv_std                                      # (N, T)

    # In-kernel embedding gather: row y[i] of the class tables for sample i.
    # num_classes is small & static -> exact unrolled masked select (VPU only).
    y = y_ref[...]                                                  # (N, 1) int32
    g_tbl = g_tbl_ref[...]                                          # (K, T) f32
    b_tbl = b_tbl_ref[...]                                          # (K, T) f32
    num_classes = g_tbl.shape[0]
    gamma = jnp.zeros_like(out)
    beta = jnp.zeros_like(out)
    for k in range(num_classes):                                    # static unroll
        sel = y == k                                                # (N, 1) bool
        gamma = jnp.where(sel, g_tbl[k:k + 1, :], gamma)
        beta = jnp.where(sel, b_tbl[k:k + 1, :], beta)

    o_ref[...] = (gamma * out + beta).astype(o_ref.dtype)


def _round_up(v, m):
    return (v + m - 1) // m * m


def _pick_tile_c(n, c, num_classes):
    """Largest lane-dense (multiple-of-128) feature tile whose double-buffered
    x/out (+ class-table) tiles fit a conservative VMEM budget sized for v7x."""
    budget_bytes = 16 * 1024 * 1024
    # 2 pipeline buffers * 4 B * (x rows + out rows + gamma/beta table rows) per lane
    bytes_per_lane = 2 * 4 * (2 * n + 2 * num_classes)
    tile_c = budget_bytes // max(bytes_per_lane, 1)
    tile_c = max(128, min(2048, (tile_c // 128) * 128))
    tile_c = min(tile_c, _round_up(c, 128))
    return tile_c


def conditional_batch_norm_1d(x, y, embed_weight):
    """x: (N, C) f32, y: (N,) int class ids, embed_weight: (num_classes, 2C) f32."""
    n, c = x.shape
    num_classes = embed_weight.shape[0]

    # Split only the tiny class table (NOT (N, C) activations) into gamma/beta.
    gamma_tbl = embed_weight[:, :c]
    beta_tbl = embed_weight[:, c:]

    tile_c = _pick_tile_c(n, c, num_classes)
    c_pad = _round_up(c, tile_c)                   # lane-dense, divides into tiles
    if c_pad != c:
        pad = ((0, 0), (0, c_pad - c))
        x = jnp.pad(x, pad)
        gamma_tbl = jnp.pad(gamma_tbl, pad)
        beta_tbl = jnp.pad(beta_tbl, pad)

    y2 = y.reshape(n, 1).astype(jnp.int32)
    grid = (c_pad // tile_c,)

    out = pl.pallas_call(
        _cbn_kernel,
        out_shape=jax.ShapeDtypeStruct((n, c_pad), x.dtype),
        grid_spec=pltpu.PrefetchScalarGridSpec(
            num_scalar_prefetch=0,
            grid=grid,
            in_specs=[
                pl.BlockSpec((n, 1), lambda j: (0, 0)),                  # y (labels)
                pl.BlockSpec((n, tile_c), lambda j: (0, j)),             # x
                pl.BlockSpec((num_classes, tile_c), lambda j: (0, j)),   # gamma table
                pl.BlockSpec((num_classes, tile_c), lambda j: (0, j)),   # beta table
            ],
            out_specs=pl.BlockSpec((n, tile_c), lambda j: (0, j)),
        ),
        compiler_params=pltpu.CompilerParams(
            dimension_semantics=("parallel",),     # shard C-tiles across v7x's 2 TCs
            vmem_limit_bytes=48 * 1024 * 1024,
        ),
        cost_estimate=pl.CostEstimate(
            flops=int((8 + 2 * num_classes) * n * c_pad),
            transcendentals=int(c_pad),
            bytes_accessed=int(4 * (2 * n * c_pad + 2 * num_classes * c_pad + n)),
        ),
    )(y2, x, gamma_tbl, beta_tbl)

    return out[:, :c] if c_pad != c else out


def _reference(x, y, embed_weight):
    mean = jnp.mean(x, axis=0, keepdims=True)
    var = jnp.mean((x - mean) ** 2, axis=0, keepdims=True)
    out = (x - mean) / jnp.sqrt(var + EPS)
    emb = embed_weight[y]
    c = x.shape[1]
    return emb[:, :c] * out + emb[:, c:]


if __name__ == "__main__":
    batch = 8
    num_features = 32
    num_classes = 4

    key = jax.random.PRNGKey(0)
    kx, ky, kw = jax.random.split(key, 3)

    # Inputs.
    x = jax.random.normal(kx, (batch, num_features), dtype=jnp.float32)
    y = jax.random.randint(ky, (batch,), 0, num_classes, dtype=jnp.int32)

    # Deterministic parameter init matching the module's __init__:
    #   embed.weight[:, :C] ~ Normal(1, 0.02),  embed.weight[:, C:] = 0
    gamma_init = 1.0 + 0.02 * jax.random.normal(
        kw, (num_classes, num_features), dtype=jnp.float32)
    beta_init = jnp.zeros((num_classes, num_features), dtype=jnp.float32)
    embed_weight = jnp.concatenate([gamma_init, beta_init], axis=1)  # (K, 2C)

    out = conditional_batch_norm_1d(x, y, embed_weight)
    out = jax.block_until_ready(out)

    ref = _reference(x, y, embed_weight)
    assert out.shape == (batch, num_features)
    assert jnp.allclose(out, ref, atol=1e-5, rtol=1e-5), float(
        jnp.max(jnp.abs(out - ref)))

    # TODO(synk): BatchNorm1d's running_mean/running_var buffer updates (training-side
    # state) are not emitted; they do not affect this forward output.
    print("KERNEL_OK")
</pallas_src>

<mosaic_0001>
module attributes {stable_mosaic.version = 11 : i64} {
  func.func @_cbn_kernel(%arg0: i32, %arg1: memref<8x1xi32, #tpu.memory_space<vmem>>, %arg2: memref<8x128xf32, #tpu.memory_space<vmem>>, %arg3: memref<4x128xf32, #tpu.memory_space<vmem>>, %arg4: memref<4x128xf32, #tpu.memory_space<vmem>>, %arg5: memref<8x128xf32, #tpu.memory_space<vmem>>) attributes {dimension_semantics = [#tpu.dimension_semantics<parallel>], iteration_bounds = array<i64: 1>, scalar_prefetch = 0 : i64, scratch_operands = 0 : i64, tpu.core_type = #tpu.core_type<tc>, window_params = [{pipeline_mode = #tpu.pipeline_mode<synchronous>, transform_indices = @transform_0, window_bounds = array<i64: 8, 1>}, {transform_indices = @transform_1, window_bounds = array<i64: 8, 128>}, {transform_indices = @transform_2, window_bounds = array<i64: 4, 128>}, {transform_indices = @transform_3, window_bounds = array<i64: 4, 128>}, {transform_indices = @transform_4, window_bounds = array<i64: 8, 128>}]} {
    %c0 = arith.constant 0 : index
    %c0_0 = arith.constant 0 : index
    %0 = vector.load %arg2[%c0, %c0_0] : memref<8x128xf32, #tpu.memory_space<vmem>>, vector<8x128xf32>
    %cst = arith.constant dense<0.000000e+00> : vector<128xf32>
    %1 = vector.multi_reduction <add>, %0, %cst [0] : vector<8x128xf32> to vector<128xf32>
    %2 = vector.shape_cast %1 : vector<128xf32> to vector<1x128xf32>
    %cst_1 = arith.constant 8.000000e+00 : f32
    %3 = vector.broadcast %cst_1 : f32 to vector<1x128xf32>
    %4 = arith.divf %2, %3 : vector<1x128xf32>
    %5 = vector.broadcast %4 : vector<1x128xf32> to vector<8x128xf32>
    %6 = arith.subf %0, %5 : vector<8x128xf32>
    %7 = vector.broadcast %4 : vector<1x128xf32> to vector<8x128xf32>
    %8 = arith.subf %0, %7 : vector<8x128xf32>
    %9 = arith.mulf %6, %8 : vector<8x128xf32>
    %cst_2 = arith.constant dense<0.000000e+00> : vector<128xf32>
    %10 = vector.multi_reduction <add>, %9, %cst_2 [0] : vector<8x128xf32> to vector<128xf32>
    %11 = vector.shape_cast %10 : vector<128xf32> to vector<1x128xf32>
    %cst_3 = arith.constant 8.000000e+00 : f32
    %12 = vector.broadcast %cst_3 : f32 to vector<1x128xf32>
    %13 = arith.divf %11, %12 : vector<1x128xf32>
    %cst_4 = arith.constant 9.99999974E-6 : f32
    %14 = vector.broadcast %cst_4 : f32 to vector<1x128xf32>
    %15 = arith.addf %13, %14 : vector<1x128xf32>
    %16 = math.rsqrt %15 : vector<1x128xf32>
    %17 = vector.broadcast %4 : vector<1x128xf32> to vector<8x128xf32>
    %18 = arith.subf %0, %17 : vector<8x128xf32>
    %19 = vector.broadcast %16 : vector<1x128xf32> to vector<8x128xf32>
    %20 = arith.mulf %18, %19 : vector<8x128xf32>
    %c0_5 = arith.constant 0 : index
    %c0_6 = arith.constant 0 : index
    %21 = vector.load %arg1[%c0_5, %c0_6] : memref<8x1xi32, #tpu.memory_space<vmem>>, vector<8x1xi32>
    %c0_7 = arith.constant 0 : index
    %c0_8 = arith.constant 0 : index
    %22 = vector.load %arg3[%c0_7, %c0_8] : memref<4x128xf32, #tpu.memory_space<vmem>>, vector<4x128xf32>
    %c0_9 = arith.constant 0 : index
    %c0_10 = arith.constant 0 : index
    %23 = vector.load %arg4[%c0_9, %c0_10] : memref<4x128xf32, #tpu.memory_space<vmem>>, vector<4x128xf32>
    %cst_11 = arith.constant 0.000000e+00 : f32
    %24 = vector.broadcast %cst_11 : f32 to vector<8x128xf32>
    %cst_12 = arith.constant 0.000000e+00 : f32
    %25 = vector.broadcast %cst_12 : f32 to vector<8x128xf32>
    %c0_i32 = arith.constant 0 : i32
    %26 = vector.broadcast %c0_i32 : i32 to vector<8x1xi32>
    %27 = arith.cmpi eq, %21, %26 : vector<8x1xi32>
    %28 = vector.extract_strided_slice %22 {offsets = [0, 0], sizes = [1, 128], strides = [1, 1]} : vector<4x128xf32> to vector<1x128xf32>
    %29 = vector.shape_cast %27 : vector<8x1xi1> to vector<8x1xi1>
    %30 = vector.broadcast %29 : vector<8x1xi1> to vector<8x128xi1>
    %31 = vector.shape_cast %28 : vector<1x128xf32> to vector<1x128xf32>
    %32 = vector.broadcast %31 : vector<1x128xf32> to vector<8x128xf32>
    %33 = arith.select %30, %32, %24 : vector<8x128xi1>, vector<8x128xf32>
    %34 = vector.extract_strided_slice %23 {offsets = [0, 0], sizes = [1, 128], strides = [1, 1]} : vector<4x128xf32> to vector<1x128xf32>
    %35 = vector.shape_cast %27 : vector<8x1xi1> to vector<8x1xi1>
    %36 = vector.broadcast %35 : vector<8x1xi1> to vector<8x128xi1>
    %37 = vector.shape_cast %34 : vector<1x128xf32> to vector<1x128xf32>
    %38 = vector.broadcast %37 : vector<1x128xf32> to vector<8x128xf32>
    %39 = arith.select %36, %38, %25 : vector<8x128xi1>, vector<8x128xf32>
    %c1_i32 = arith.constant 1 : i32
    %40 = vector.broadcast %c1_i32 : i32 to vector<8x1xi32>
    %41 = arith.cmpi eq, %21, %40 : vector<8x1xi32>
    %42 = vector.extract_strided_slice %22 {offsets = [1, 0], sizes = [1, 128], strides = [1, 1]} : vector<4x128xf32> to vector<1x128xf32>
    %43 = vector.shape_cast %41 : vector<8x1xi1> to vector<8x1xi1>
    %44 = vector.broadcast %43 : vector<8x1xi1> to vector<8x128xi1>
    %45 = vector.shape_cast %42 : vector<1x128xf32> to vector<1x128xf32>
    %46 = vector.broadcast %45 : vector<1x128xf32> to vector<8x128xf32>
    %47 = arith.select %44, %46, %33 : vector<8x128xi1>, vector<8x128xf32>
    %48 = vector.extract_strided_slice %23 {offsets = [1, 0], sizes = [1, 128], strides = [1, 1]} : vector<4x128xf32> to vector<1x128xf32>
    %49 = vector.shape_cast %41 : vector<8x1xi1> to vector<8x1xi1>
    %50 = vector.broadcast %49 : vector<8x1xi1> to vector<8x128xi1>
    %51 = vector.shape_cast %48 : vector<1x128xf32> to vector<1x128xf32>
    %52 = vector.broadcast %51 : vector<1x128xf32> to vector<8x128xf32>
    %53 = arith.select %50, %52, %39 : vector<8x128xi1>, vector<8x128xf32>
    %c2_i32 = arith.constant 2 : i32
    %54 = vector.broadcast %c2_i32 : i32 to vector<8x1xi32>
    %55 = arith.cmpi eq, %21, %54 : vector<8x1xi32>
    %56 = vector.extract_strided_slice %22 {offsets = [2, 0], sizes = [1, 128], strides = [1, 1]} : vector<4x128xf32> to vector<1x128xf32>
    %57 = vector.shape_cast %55 : vector<8x1xi1> to vector<8x1xi1>
    %58 = vector.broadcast %57 : vector<8x1xi1> to vector<8x128xi1>
    %59 = vector.shape_cast %56 : vector<1x128xf32> to vector<1x128xf32>
    %60 = vector.broadcast %59 : vector<1x128xf32> to vector<8x128xf32>
    %61 = arith.select %58, %60, %47 : vector<8x128xi1>, vector<8x128xf32>
    %62 = vector.extract_strided_slice %23 {offsets = [2, 0], sizes = [1, 128], strides = [1, 1]} : vector<4x128xf32> to vector<1x128xf32>
    %63 = vector.shape_cast %55 : vector<8x1xi1> to vector<8x1xi1>
    %64 = vector.broadcast %63 : vector<8x1xi1> to vector<8x128xi1>
    %65 = vector.shape_cast %62 : vector<1x128xf32> to vector<1x128xf32>
    %66 = vector.broadcast %65 : vector<1x128xf32> to vector<8x128xf32>
    %67 = arith.select %64, %66, %53 : vector<8x128xi1>, vector<8x128xf32>
    %c3_i32 = arith.constant 3 : i32
    %68 = vector.broadcast %c3_i32 : i32 to vector<8x1xi32>
    %69 = arith.cmpi eq, %21, %68 : vector<8x1xi32>
    %70 = vector.extract_strided_slice %22 {offsets = [3, 0], sizes = [1, 128], strides = [1, 1]} : vector<4x128xf32> to vector<1x128xf32>
    %71 = vector.shape_cast %69 : vector<8x1xi1> to vector<8x1xi1>
    %72 = vector.broadcast %71 : vector<8x1xi1> to vector<8x128xi1>
    %73 = vector.shape_cast %70 : vector<1x128xf32> to vector<1x128xf32>
    %74 = vector.broadcast %73 : vector<1x128xf32> to vector<8x128xf32>
    %75 = arith.select %72, %74, %61 : vector<8x128xi1>, vector<8x128xf32>
    %76 = vector.extract_strided_slice %23 {offsets = [3, 0], sizes = [1, 128], strides = [1, 1]} : vector<4x128xf32> to vector<1x128xf32>
    %77 = vector.shape_cast %69 : vector<8x1xi1> to vector<8x1xi1>
    %78 = vector.broadcast %77 : vector<8x1xi1> to vector<8x128xi1>
    %79 = vector.shape_cast %76 : vector<1x128xf32> to vector<1x128xf32>
    %80 = vector.broadcast %79 : vector<1x128xf32> to vector<8x128xf32>
    %81 = arith.select %78, %80, %67 : vector<8x128xi1>, vector<8x128xf32>
    %82 = arith.mulf %75, %20 : vector<8x128xf32>
    %83 = arith.addf %82, %81 : vector<8x128xf32>
    %c0_13 = arith.constant 0 : index
    %c0_14 = arith.constant 0 : index
    %84 = vector.load %arg5[%c0_13, %c0_14] : memref<8x128xf32, #tpu.memory_space<vmem>>, vector<8x128xf32>
    tpu.vector_store %arg5[%c0_13, %c0_14], %83 {strides = array<i32>} : memref<8x128xf32, #tpu.memory_space<vmem>>, vector<8x128xf32>,
    return
  }
  func.func @transform_0(%arg0: i32) -> (i32, i32) {
    %c0_i32 = arith.constant 0 : i32
    %c0_i32_0 = arith.constant 0 : i32
    %c0_i32_1 = arith.constant 0 : i32
    return %c0_i32, %c0_i32_0 : i32, i32
  }
  func.func @transform_1(%arg0: i32) -> (i32, i32) {
    %c0_i32 = arith.constant 0 : i32
    %c0_i32_0 = arith.constant 0 : i32
    return %c0_i32, %arg0 : i32, i32
  }
  func.func @transform_2(%arg0: i32) -> (i32, i32) {
    %c0_i32 = arith.constant 0 : i32
    %c0_i32_0 = arith.constant 0 : i32
    return %c0_i32, %arg0 : i32, i32
  }
  func.func @transform_3(%arg0: i32) -> (i32, i32) {
    %c0_i32 = arith.constant 0 : i32
    %c0_i32_0 = arith.constant 0 : i32
    return %c0_i32, %arg0 : i32, i32
  }
  func.func @transform_4(%arg0: i32) -> (i32, i32) {
    %c0_i32 = arith.constant 0 : i32
    %c0_i32_0 = arith.constant 0 : i32
    return %c0_i32, %arg0 : i32, i32
  }
}

</mosaic_0001>

<llo_original>
// kernel: tpu_custom_call.1
$region0: #{tpu_custom_call.1}
  #allocation0 [shape = 'u32[]', space=smem, size = 0x4, offset = 0x4, fixed_abs, tag = 'smem constant byte address 0x4 - core index']
  #allocation1 [shape = 'u32[144,128]{1,0:T(1,128)}', space=vmem, size = 0x12000, scoped, tag = 'internal scratch']
  %s0 = inlined_call_operand.vmem [shape: s32[8,1], index: 0, kind: input, shape index: {}]
  %s1 = inlined_call_operand.vmem [shape: f32[8,128], index: 1, kind: input, shape index: {}]
  %s2 = inlined_call_operand.vmem [shape: f32[4,128], index: 2, kind: input, shape index: {}]
  %s3 = inlined_call_operand.vmem [shape: f32[4,128], index: 3, kind: input, shape index: {}]
  %s4 = inlined_call_operand.hbm [shape: f32[8,128], index: 4, kind: output, shape index: {}]
  %s5 = sld [smem:[#allocation0]]
  $region26: #{tpu_custom_call.1} parent=0
    _
  %s7 = ssub.s32 1, %s5
  %s8 = scalar_select 0, %s7, %s5
  $region1: #{tpu_custom_call.1} parent=0
    #allocation2 [shape = 'u8[4096]{0}', space=vmem, size = 0x1000, scoped, tag = 'output window, operand 0, single buffered']
    #allocation3 [shape = 's32[1]{0}', space=sflag, size = 0x4, scoped, tag = 'scoped memory for tpu_custom_call.1']
    %9 = vsyncpa [#allocation3], 0
    // Predicated region
    $region2: #{tpu_custom_call.1} parent=1 // pred_check
      _
    $region3: #{tpu_custom_call.1} parent=1 // pred_check_branch
      %11 = sbr.rel (0) target = $region5
    $region4: #{tpu_custom_call.1} parent=1 // pred_region
      _
    $region5: #{tpu_custom_call.1} parent=1 // pred_fallthru
      _
    // Predicated region
    $region6: #{tpu_custom_call.1} parent=1 // pred_check
      _
    $region7: #{tpu_custom_call.1} parent=1 // pred_check_branch
      %13 = sbr.rel (0) target = $region9
    $region8: #{tpu_custom_call.1} parent=1 // pred_region
      _
    $region9: #{tpu_custom_call.1} parent=1 // pred_fallthru
      _
    // Predicated region
    $region10: #{tpu_custom_call.1} parent=1 // pred_check
      _
    $region11: #{tpu_custom_call.1} parent=1 // pred_check_branch
      %15 = sbr.rel (0) target = $region13
    $region12: #{tpu_custom_call.1} parent=1 // pred_region
      _
    $region13: #{tpu_custom_call.1} parent=1 // pred_fallthru
      _
    // Predicated region
    $region14: #{tpu_custom_call.1} parent=1 // pred_check
      _
    $region15: #{tpu_custom_call.1} parent=1 // pred_check_branch
      %17 = sbr.rel (0) target = $region17
    $region16: #{tpu_custom_call.1} parent=1 // pred_region
      _
    $region17: #{tpu_custom_call.1} parent=1 // pred_fallthru
      _
    %v18 = vld [vmem:[%s1] sm:$0xff]
    %v19 = vrot.slane %v18, 4
    %v20 = vadd.f32 %v18, %v19
    %v21 = vrot.slane %v20, 2
    %v22 = vadd.f32 %v20, %v21
    %v23 = vrot.slane %v22, 1
    %v24 = vadd.f32 %v22, %v23
    %v25 = vrcp.pop 8.0
    %v26 = vmul.f32 %v24, %v25
    %v27 = vsub.f32 %v18, %v26
    %v28 = vmul.f32 %v27, %v27
    %v29 = vrot.slane %v28, 4
    %v30 = vadd.f32 %v28, %v29
    %v31 = vrot.slane %v30, 2
    %v32 = vadd.f32 %v30, %v31
    %v33 = vrot.slane %v32, 1
    %v34 = vadd.f32 %v32, %v33
    %v35 = vmul.f32 %v34, %v25
    %v36 = vadd.f32 %v35, 1e-05
    %v37 = vrsqrt.pop %v36
    %v38 = vmul.f32 %v27, %v37
    %v39 = vld [vmem:[%s0] sm:$0xff]
    %v40 = vld [vmem:[%s2] sm:$0xf]
    %v41 = vld [vmem:[%s3] sm:$0xf]
    %vm42 = vcmp.eq.s32.totalorder %v39, 0
    %v43 = vsel %vm42, 1, 0
    %44 = vset.pattern.permute.xlu0 0
    %45 = vperm.xlu0 %44, %v43
    %v46 = vpop.permute.xlu0 %45
    %vm47 = vcmp.eq.s32.totalorder %v46, 1
    %v48 = vlaneseq
    %v49 = vshrl.u32 %v48, 7
    %v50 = vsub.s32 0, %v49
    %v51 = vrot.slane %v40, %v50
    %v52 = vsel %vm47, %v51, 0.0
    %v53 = vlaneseq
    %v54 = vshrl.u32 %v53, 7
    %v55 = vsub.s32 0, %v54
    %v56 = vrot.slane %v41, %v55
    %v57 = vsel %vm47, %v56, 0.0
    %vm58 = vcmp.eq.s32.totalorder %v39, 1
    %v59 = vsel %vm58, 1, 0
    %60 = vset.pattern.permute.xlu0 0
    %61 = vperm.xlu0 %60, %v59
    %v62 = vpop.permute.xlu0 %61
    %vm63 = vcmp.eq.s32.totalorder %v62, 1
    %v64 = vlaneseq
    %v65 = vshrl.u32 %v64, 7
    %v66 = vsub.s32 1, %v65
    %v67 = vrot.slane %v40, %v66
    %v68 = vsel %vm63, %v67, %v52
    %v69 = vlaneseq
    %v70 = vshrl.u32 %v69, 7
    %v71 = vsub.s32 1, %v70
    %v72 = vrot.slane %v41, %v71
    %v73 = vsel %vm63, %v72, %v57
    %vm74 = vcmp.eq.s32.totalorder %v39, 2
    %v75 = vsel %vm74, 1, 0
    %76 = vset.pattern.permute.xlu0 0
    %77 = vperm.xlu0 %76, %v75
    %v78 = vpop.permute.xlu0 %77
    %vm79 = vcmp.eq.s32.totalorder %v78, 1
    %v80 = vlaneseq
    %v81 = vshrl.u32 %v80, 7
    %v82 = vsub.s32 2, %v81
    %v83 = vrot.slane %v40, %v82
    %v84 = vsel %vm79, %v83, %v68
    %v85 = vlaneseq
    %v86 = vshrl.u32 %v85, 7
    %v87 = vsub.s32 2, %v86
    %v88 = vrot.slane %v41, %v87
    %v89 = vsel %vm79, %v88, %v73
    %vm90 = vcmp.eq.s32.totalorder %v39, 3
    %v91 = vsel %vm90, 1, 0
    %92 = vset.pattern.permute.xlu0 0
    %93 = vperm.xlu0 %92, %v91
    %v94 = vpop.permute.xlu0 %93
    %vm95 = vcmp.eq.s32.totalorder %v94, 1
    %v96 = vlaneseq
    %v97 = vshrl.u32 %v96, 7
    %v98 = vsub.s32 3, %v97
    %v99 = vrot.slane %v40, %v98
    %v100 = vsel %vm95, %v99, %v84
    %v101 = vlaneseq
    %v102 = vshrl.u32 %v101, 7
    %v103 = vsub.s32 3, %v102
    %v104 = vrot.slane %v41, %v103
    %v105 = vsel %vm95, %v104, %v89
    %v106 = vmul.f32 %v100, %v38
    %v107 = vadd.f32 %v106, %v105
    %108 = vst [vmem:[#allocation2] sm:$0xff] %v107
    // Predicated region
    $region18: #{tpu_custom_call.1} parent=1 // pred_check
      _
    $region19: #{tpu_custom_call.1} parent=1 // pred_check_branch
      %110 = sbr.rel (0) target = $region21
    $region20: #{tpu_custom_call.1} parent=1 // pred_region
      %s112 = ssub.s32 128, 128
      %113 = vsyncadd [#allocation3], %s112
      %s115 = sshll.u32 [#allocation2], 4
      %s116 = int_to_ptr.vmem [resolvable:$true] %s115
      %118 = dma.vmem_to_hbm [thread:$0]  %s116, 128, %s4, [#allocation3]
    $region21: #{tpu_custom_call.1} parent=1 // pred_fallthru
      _
    // Predicated region
    $region22: #{tpu_custom_call.1} parent=1 // pred_check
      _
    $region23: #{tpu_custom_call.1} parent=1 // pred_check_branch
      %120 = sbr.rel (0) target = $region25
    $region24: #{tpu_custom_call.1} parent=1 // pred_region
      %121 = dma.done [#allocation3], 128
    $region25: #{tpu_custom_call.1} parent=1 // pred_fallthru
      _
    %122 = vsyncpa [#allocation3], 1

</llo_original>
